<compile_context>
chip_gen: v5e
topology: v5e:2x2
jax: 0.10.0
libtpu: 0.0.40
codegen_flags: <defaults>
</compile_context>

<pallas_src>
import functools

import jax
import jax.numpy as jnp
from jax import lax
from jax.experimental import pallas as pl
from jax.experimental.pallas import tpu as pltpu

LANE = 128  # f32 lane tile width


# ----------------------------------------------------------------------------
# One-time parameter preparation (fuse + zero-pad to lane tiles)
# ----------------------------------------------------------------------------
def prepare_params(params, d_in, dh_pad=LANE):
    w_gate, b_gate, w, b, tau, w_out, b_out = [
        jnp.asarray(p, jnp.float32) for p in params
    ]
    d_hid, d_out = w_out.shape
    assert d_hid <= dh_pad

    def pad_cols(m, width):
        return jnp.pad(m, ((0, 0), (0, width - m.shape[1])))

    def pad_rows(m, height):
        return jnp.pad(m, ((0, height - m.shape[0]), (0, 0)))

    # Split "concat([x, h]) @ W" into x-part / h-part, fuse gate|f along the
    # output axis, and zero-pad each half to a full 128-lane tile.
    wg_x, wg_h = w_gate[:d_in], w_gate[d_in:]
    wf_x, wf_h = w[:d_in], w[d_in:]

    w_x_cat = jnp.concatenate(
        [pad_cols(wg_x, dh_pad), pad_cols(wf_x, dh_pad)], axis=1)      # (d_in, 2*dh_pad)
    w_h_cat = pad_rows(
        jnp.concatenate([pad_cols(wg_h, dh_pad), pad_cols(wf_h, dh_pad)], axis=1),
        dh_pad)                                                        # (dh_pad, 2*dh_pad)
    b_cat = jnp.concatenate(
        [pad_cols(b_gate[None, :], dh_pad), pad_cols(b[None, :], dh_pad)],
        axis=1)                                                        # (1, 2*dh_pad)

    # bf16 recurrent weight -> single MXU pass per Euler step (f32 accumulate).
    w_h_cat_bf16 = w_h_cat.astype(jnp.bfloat16)

    # Exact 1/tau; padded lanes set to 1.0 (finite; padded h lanes are 0 anyway).
    inv_tau = jnp.pad(1.0 / tau, (0, dh_pad - d_hid), constant_values=1.0)[None, :]

    return dict(
        w_x_cat=w_x_cat,
        w_h_cat_bf16=w_h_cat_bf16,
        b_cat=b_cat,
        inv_tau=inv_tau,
        w_out=pad_rows(w_out, dh_pad),                                 # (dh_pad, d_out)
        b_out=b_out[None, :],                                          # (1, d_out)
        d_out=int(d_out),
        dh_pad=int(dh_pad),
    )


# ----------------------------------------------------------------------------
# Pallas kernel + wrapper
# ----------------------------------------------------------------------------
def jit_ode_solver_forward(x, t_eval, prepared):
    """Pallas equivalent of JITODESolver.forward(x, t_eval)."""
    x = jnp.asarray(x, jnp.float32)
    if x.ndim == 1:  # mirror `x.unsqueeze(1)` in the reference
        x = x[:, None]

    B = x.shape[0]
    T = int(t_eval.shape[0])
    n_steps = max(T - 1, 0)
    dh_pad = prepared["dh_pad"]
    d_out = prepared["d_out"]

    def kernel(t_ref, x_ref, wxcat_ref, whcat_ref, bcat_ref, invtau_ref,
               wout_ref, bout_ref, o_ref):
        # dt from t_eval in SMEM (T is static; 0.1 fallback when len==1).
        dt_s = (t_ref[1] - t_ref[0]) if T > 1 else jnp.float32(0.1)

        # Time-invariant prologue (hoisted out of the Euler loop):
        #   x @ [wg_x | w_x] + [b_gate | b]   -> (B, 2*dh_pad)
        xgf = jnp.dot(x_ref[...], wxcat_ref[...],
                      preferred_element_type=jnp.float32) + bcat_ref[...]

        # a = dt/tau and (1 - a): computed and broadcast ONCE before the loop.
        a = jnp.broadcast_to(dt_s * invtau_ref[...], (B, dh_pad))
        one_minus_a = 1.0 - a

        whcat = whcat_ref[...]                        # (dh_pad, 2*dh_pad) bf16
        h0 = jnp.zeros((B, dh_pad), jnp.float32)

        def body(_, h):
            # Single fused bf16 recurrent matmul per step: h @ [wg_h | w_h].
            gf = xgf + jnp.dot(h.astype(jnp.bfloat16), whcat,
                               preferred_element_type=jnp.float32)
            gate_in = gf[:, :dh_pad]                  # lane-aligned slice
            f = gf[:, dh_pad:]                        # lane-aligned slice
            # sigmoid on the EUP: exp + approximate reciprocal.
            gate = pl.reciprocal(1.0 + jnp.exp(-gate_in), approx=True)
            # h_new = h + dt*(-h + f*gate)/tau == h*(1-a) + (f*gate)*a
            return h * one_minus_a + (f * gate) * a

        # n_steps is static -> fully unroll the short serial loop.
        h_final = lax.fori_loop(0, n_steps, body, h0, unroll=True)

        # Output projection (padded h lanes are exactly 0, padded w_out rows 0).
        o_ref[...] = (jnp.dot(h_final, wout_ref[...],
                              preferred_element_type=jnp.float32)
                      + bout_ref[...])

    vmem = pl.BlockSpec(memory_space=pltpu.MemorySpace.VMEM)
    smem = pl.BlockSpec(memory_space=pltpu.MemorySpace.SMEM)

    return pl.pallas_call(
        kernel,
        out_shape=jax.ShapeDtypeStruct((B, d_out), jnp.float32),
        in_specs=[smem] + [vmem] * 7,
        out_specs=vmem,
    )(jnp.asarray(t_eval, jnp.float32), x,
      prepared["w_x_cat"], prepared["w_h_cat_bf16"], prepared["b_cat"],
      prepared["inv_tau"], prepared["w_out"], prepared["b_out"])


# ----------------------------------------------------------------------------
# Pure-JAX reference (mirrors the PyTorch module) for a sanity check
# ----------------------------------------------------------------------------
def reference_forward(x, t_eval, params):
    w_gate, b_gate, w, b, tau, w_out, b_out = params
    if x.ndim == 1:
        x = x[:, None]
    B = x.shape[0]
    D_hid = w_out.shape[0]
    h = jnp.zeros((B, D_hid), jnp.float32)
    T = t_eval.shape[0]
    dt = t_eval[1] - t_eval[0] if T > 1 else jnp.float32(0.1)
    for _ in range(T - 1):
        combined = jnp.concatenate([x, h], axis=1)
        gate = jax.nn.sigmoid(combined @ w_gate + b_gate)
        f = combined @ w + b
        dhdt = (-h + f * gate) / tau
        h = h + dhdt * dt
    return h @ w_out + b_out


# ----------------------------------------------------------------------------
# Deterministic parameter / input construction and driver
# ----------------------------------------------------------------------------
def make_params(key, d_in, d_hid, d_out):
    ks = jax.random.split(key, 7)
    w_gate = 0.1 * jax.random.normal(ks[0], (d_in + d_hid, d_hid), jnp.float32)
    b_gate = 0.1 * jax.random.normal(ks[1], (d_hid,), jnp.float32)
    w = 0.1 * jax.random.normal(ks[2], (d_in + d_hid, d_hid), jnp.float32)
    b = 0.1 * jax.random.normal(ks[3], (d_hid,), jnp.float32)
    tau = 0.5 + jnp.abs(jax.random.normal(ks[4], (d_hid,), jnp.float32))
    w_out = 0.1 * jax.random.normal(ks[5], (d_hid, d_out), jnp.float32)
    b_out = 0.1 * jax.random.normal(ks[6], (d_out,), jnp.float32)
    return (w_gate, b_gate, w, b, tau, w_out, b_out)


if __name__ == "__main__":
    B, D_IN, D_HID, D_OUT, T = 8, 16, 32, 8, 8

    key = jax.random.PRNGKey(0)
    k_param, k_x = jax.random.split(key)

    params = make_params(k_param, D_IN, D_HID, D_OUT)
    x = jax.random.normal(k_x, (B, D_IN), jnp.float32)
    t_eval = jnp.linspace(0.0, 1.0, T).astype(jnp.float32)

    prepared = prepare_params(params, D_IN)  # one-time weight prep (off per-call path)
    fwd = jax.jit(functools.partial(jit_ode_solver_forward, prepared=prepared))

    out = jax.block_until_ready(fwd(x, t_eval))

    ref = reference_forward(x, t_eval, params)
    assert out.shape == (B, D_OUT)
    assert jnp.allclose(out, ref, rtol=2e-2, atol=2e-2), "mismatch vs reference"

    print("KERNEL_OK")
</pallas_src>

<mosaic_0001>
module attributes {stable_mosaic.version = 11 : i64} {
  func.func @kernel(%arg0: memref<8xf32, #tpu.memory_space<smem>>, %arg1: memref<8x16xf32, #tpu.memory_space<vmem>>, %arg2: memref<16x256xf32, #tpu.memory_space<vmem>>, %arg3: memref<128x256xbf16, #tpu.memory_space<vmem>>, %arg4: memref<1x256xf32, #tpu.memory_space<vmem>>, %arg5: memref<1x128xf32, #tpu.memory_space<vmem>>, %arg6: memref<128x8xf32, #tpu.memory_space<vmem>>, %arg7: memref<1x8xf32, #tpu.memory_space<vmem>>, %arg8: memref<8x8xf32, #tpu.memory_space<vmem>>) attributes {dimension_semantics = [], scalar_prefetch = 0 : i64, scratch_operands = 0 : i64, tpu.core_type = #tpu.core_type<tc>} {
    %c1 = arith.constant 1 : index
    %0 = memref.load %arg0[%c1] : memref<8xf32, #tpu.memory_space<smem>>
    %c0 = arith.constant 0 : index
    %1 = memref.load %arg0[%c0] : memref<8xf32, #tpu.memory_space<smem>>
    %2 = arith.subf %0, %1 : f32
    %c0_0 = arith.constant 0 : index
    %c0_1 = arith.constant 0 : index
    %3 = vector.load %arg1[%c0_0, %c0_1] : memref<8x16xf32, #tpu.memory_space<vmem>>, vector<8x16xf32>
    %c0_2 = arith.constant 0 : index
    %c0_3 = arith.constant 0 : index
    %4 = vector.load %arg2[%c0_2, %c0_3] : memref<16x256xf32, #tpu.memory_space<vmem>>, vector<16x256xf32>
    %cst = arith.constant dense<0.000000e+00> : vector<8x256xf32>
    %5 = tpu.matmul %3, %4, %cst {dimension_numbers = #tpu.dot_dimension_numbers<[1], [0], [0], [1], [0, 0, 1, 1], [], []>} : vector<8x16xf32>, vector<16x256xf32>, vector<8x256xf32> -> vector<8x256xf32>
    %c0_4 = arith.constant 0 : index
    %c0_5 = arith.constant 0 : index
    %6 = vector.load %arg4[%c0_4, %c0_5] : memref<1x256xf32, #tpu.memory_space<vmem>>, vector<1x256xf32>
    %7 = vector.broadcast %6 : vector<1x256xf32> to vector<8x256xf32>
    %8 = arith.addf %5, %7 : vector<8x256xf32>
    %c0_6 = arith.constant 0 : index
    %c0_7 = arith.constant 0 : index
    %9 = vector.load %arg5[%c0_6, %c0_7] : memref<1x128xf32, #tpu.memory_space<vmem>>, vector<1x128xf32>
    %10 = vector.broadcast %2 : f32 to vector<1x128xf32>
    %11 = arith.mulf %10, %9 : vector<1x128xf32>
    %12 = vector.shape_cast %11 : vector<1x128xf32> to vector<1x128xf32>
    %13 = vector.broadcast %12 : vector<1x128xf32> to vector<8x128xf32>
    %cst_8 = arith.constant 1.000000e+00 : f32
    %14 = vector.broadcast %cst_8 : f32 to vector<8x128xf32>
    %15 = arith.subf %14, %13 : vector<8x128xf32>
    %c0_9 = arith.constant 0 : index
    %c0_10 = arith.constant 0 : index
    %16 = vector.load %arg3[%c0_9, %c0_10] : memref<128x256xbf16, #tpu.memory_space<vmem>>, vector<128x256xbf16>
    %cst_11 = arith.constant 0.000000e+00 : f32
    %17 = vector.broadcast %cst_11 : f32 to vector<8x128xf32>
    %c0_i32 = arith.constant 0 : i32
    %18 = arith.truncf %17 : vector<8x128xf32> to vector<8x128xbf16>
    %cst_12 = arith.constant dense<0.000000e+00> : vector<8x256xf32>
    %19 = tpu.matmul %18, %16, %cst_12 {dimension_numbers = #tpu.dot_dimension_numbers<[1], [0], [0], [1], [0, 0, 1, 1], [], []>} : vector<8x128xbf16>, vector<128x256xbf16>, vector<8x256xf32> -> vector<8x256xf32>
    %20 = arith.addf %8, %19 : vector<8x256xf32>
    %21 = vector.extract_strided_slice %20 {offsets = [0, 0], sizes = [8, 128], strides = [1, 1]} : vector<8x256xf32> to vector<8x128xf32>
    %22 = vector.extract_strided_slice %20 {offsets = [0, 128], sizes = [8, 128], strides = [1, 1]} : vector<8x256xf32> to vector<8x128xf32>
    %cst_13 = arith.constant 0.000000e+00 : f32
    %23 = vector.broadcast %cst_13 : f32 to vector<8x128xf32>
    %24 = arith.subf %23, %21 : vector<8x128xf32>
    %25 = math.exp %24 : vector<8x128xf32>
    %cst_14 = arith.constant 1.000000e+00 : f32
    %26 = vector.broadcast %cst_14 : f32 to vector<8x128xf32>
    %27 = arith.addf %26, %25 : vector<8x128xf32>
    %28 = tpu.reciprocal %27 {approx = true} : vector<8x128xf32> -> vector<8x128xf32>
    %29 = arith.mulf %17, %15 : vector<8x128xf32>
    %30 = arith.mulf %22, %28 : vector<8x128xf32>
    %31 = arith.mulf %30, %13 : vector<8x128xf32>
    %32 = arith.addf %29, %31 : vector<8x128xf32>
    %c1_i32 = arith.constant 1 : i32
    %33 = arith.truncf %32 : vector<8x128xf32> to vector<8x128xbf16>
    %cst_15 = arith.constant dense<0.000000e+00> : vector<8x256xf32>
    %34 = tpu.matmul %33, %16, %cst_15 {dimension_numbers = #tpu.dot_dimension_numbers<[1], [0], [0], [1], [0, 0, 1, 1], [], []>} : vector<8x128xbf16>, vector<128x256xbf16>, vector<8x256xf32> -> vector<8x256xf32>
    %35 = arith.addf %8, %34 : vector<8x256xf32>
    %36 = vector.extract_strided_slice %35 {offsets = [0, 0], sizes = [8, 128], strides = [1, 1]} : vector<8x256xf32> to vector<8x128xf32>
    %37 = vector.extract_strided_slice %35 {offsets = [0, 128], sizes = [8, 128], strides = [1, 1]} : vector<8x256xf32> to vector<8x128xf32>
    %cst_16 = arith.constant 0.000000e+00 : f32
    %38 = vector.broadcast %cst_16 : f32 to vector<8x128xf32>
    %39 = arith.subf %38, %36 : vector<8x128xf32>
    %40 = math.exp %39 : vector<8x128xf32>
    %cst_17 = arith.constant 1.000000e+00 : f32
    %41 = vector.broadcast %cst_17 : f32 to vector<8x128xf32>
    %42 = arith.addf %41, %40 : vector<8x128xf32>
    %43 = tpu.reciprocal %42 {approx = true} : vector<8x128xf32> -> vector<8x128xf32>
    %44 = arith.mulf %32, %15 : vector<8x128xf32>
    %45 = arith.mulf %37, %43 : vector<8x128xf32>
    %46 = arith.mulf %45, %13 : vector<8x128xf32>
    %47 = arith.addf %44, %46 : vector<8x128xf32>
    %c2_i32 = arith.constant 2 : i32
    %48 = arith.truncf %47 : vector<8x128xf32> to vector<8x128xbf16>
    %cst_18 = arith.constant dense<0.000000e+00> : vector<8x256xf32>
    %49 = tpu.matmul %48, %16, %cst_18 {dimension_numbers = #tpu.dot_dimension_numbers<[1], [0], [0], [1], [0, 0, 1, 1], [], []>} : vector<8x128xbf16>, vector<128x256xbf16>, vector<8x256xf32> -> vector<8x256xf32>
    %50 = arith.addf %8, %49 : vector<8x256xf32>
    %51 = vector.extract_strided_slice %50 {offsets = [0, 0], sizes = [8, 128], strides = [1, 1]} : vector<8x256xf32> to vector<8x128xf32>
    %52 = vector.extract_strided_slice %50 {offsets = [0, 128], sizes = [8, 128], strides = [1, 1]} : vector<8x256xf32> to vector<8x128xf32>
    %cst_19 = arith.constant 0.000000e+00 : f32
    %53 = vector.broadcast %cst_19 : f32 to vector<8x128xf32>
    %54 = arith.subf %53, %51 : vector<8x128xf32>
    %55 = math.exp %54 : vector<8x128xf32>
    %cst_20 = arith.constant 1.000000e+00 : f32
    %56 = vector.broadcast %cst_20 : f32 to vector<8x128xf32>
    %57 = arith.addf %56, %55 : vector<8x128xf32>
    %58 = tpu.reciprocal %57 {approx = true} : vector<8x128xf32> -> vector<8x128xf32>
    %59 = arith.mulf %47, %15 : vector<8x128xf32>
    %60 = arith.mulf %52, %58 : vector<8x128xf32>
    %61 = arith.mulf %60, %13 : vector<8x128xf32>
    %62 = arith.addf %59, %61 : vector<8x128xf32>
    %c3_i32 = arith.constant 3 : i32
    %63 = arith.truncf %62 : vector<8x128xf32> to vector<8x128xbf16>
    %cst_21 = arith.constant dense<0.000000e+00> : vector<8x256xf32>
    %64 = tpu.matmul %63, %16, %cst_21 {dimension_numbers = #tpu.dot_dimension_numbers<[1], [0], [0], [1], [0, 0, 1, 1], [], []>} : vector<8x128xbf16>, vector<128x256xbf16>, vector<8x256xf32> -> vector<8x256xf32>
    %65 = arith.addf %8, %64 : vector<8x256xf32>
    %66 = vector.extract_strided_slice %65 {offsets = [0, 0], sizes = [8, 128], strides = [1, 1]} : vector<8x256xf32> to vector<8x128xf32>
    %67 = vector.extract_strided_slice %65 {offsets = [0, 128], sizes = [8, 128], strides = [1, 1]} : vector<8x256xf32> to vector<8x128xf32>
    %cst_22 = arith.constant 0.000000e+00 : f32
    %68 = vector.broadcast %cst_22 : f32 to vector<8x128xf32>
    %69 = arith.subf %68, %66 : vector<8x128xf32>
    %70 = math.exp %69 : vector<8x128xf32>
    %cst_23 = arith.constant 1.000000e+00 : f32
    %71 = vector.broadcast %cst_23 : f32 to vector<8x128xf32>
    %72 = arith.addf %71, %70 : vector<8x128xf32>
    %73 = tpu.reciprocal %72 {approx = true} : vector<8x128xf32> -> vector<8x128xf32>
    %74 = arith.mulf %62, %15 : vector<8x128xf32>
    %75 = arith.mulf %67, %73 : vector<8x128xf32>
    %76 = arith.mulf %75, %13 : vector<8x128xf32>
    %77 = arith.addf %74, %76 : vector<8x128xf32>
    %c4_i32 = arith.constant 4 : i32
    %78 = arith.truncf %77 : vector<8x128xf32> to vector<8x128xbf16>
    %cst_24 = arith.constant dense<0.000000e+00> : vector<8x256xf32>
    %79 = tpu.matmul %78, %16, %cst_24 {dimension_numbers = #tpu.dot_dimension_numbers<[1], [0], [0], [1], [0, 0, 1, 1], [], []>} : vector<8x128xbf16>, vector<128x256xbf16>, vector<8x256xf32> -> vector<8x256xf32>
    %80 = arith.addf %8, %79 : vector<8x256xf32>
    %81 = vector.extract_strided_slice %80 {offsets = [0, 0], sizes = [8, 128], strides = [1, 1]} : vector<8x256xf32> to vector<8x128xf32>
    %82 = vector.extract_strided_slice %80 {offsets = [0, 128], sizes = [8, 128], strides = [1, 1]} : vector<8x256xf32> to vector<8x128xf32>
    %cst_25 = arith.constant 0.000000e+00 : f32
    %83 = vector.broadcast %cst_25 : f32 to vector<8x128xf32>
    %84 = arith.subf %83, %81 : vector<8x128xf32>
    %85 = math.exp %84 : vector<8x128xf32>
    %cst_26 = arith.constant 1.000000e+00 : f32
    %86 = vector.broadcast %cst_26 : f32 to vector<8x128xf32>
    %87 = arith.addf %86, %85 : vector<8x128xf32>
    %88 = tpu.reciprocal %87 {approx = true} : vector<8x128xf32> -> vector<8x128xf32>
    %89 = arith.mulf %77, %15 : vector<8x128xf32>
    %90 = arith.mulf %82, %88 : vector<8x128xf32>
    %91 = arith.mulf %90, %13 : vector<8x128xf32>
    %92 = arith.addf %89, %91 : vector<8x128xf32>
    %c5_i32 = arith.constant 5 : i32
    %93 = arith.truncf %92 : vector<8x128xf32> to vector<8x128xbf16>
    %cst_27 = arith.constant dense<0.000000e+00> : vector<8x256xf32>
    %94 = tpu.matmul %93, %16, %cst_27 {dimension_numbers = #tpu.dot_dimension_numbers<[1], [0], [0], [1], [0, 0, 1, 1], [], []>} : vector<8x128xbf16>, vector<128x256xbf16>, vector<8x256xf32> -> vector<8x256xf32>
    %95 = arith.addf %8, %94 : vector<8x256xf32>
    %96 = vector.extract_strided_slice %95 {offsets = [0, 0], sizes = [8, 128], strides = [1, 1]} : vector<8x256xf32> to vector<8x128xf32>
    %97 = vector.extract_strided_slice %95 {offsets = [0, 128], sizes = [8, 128], strides = [1, 1]} : vector<8x256xf32> to vector<8x128xf32>
    %cst_28 = arith.constant 0.000000e+00 : f32
    %98 = vector.broadcast %cst_28 : f32 to vector<8x128xf32>
    %99 = arith.subf %98, %96 : vector<8x128xf32>
    %100 = math.exp %99 : vector<8x128xf32>
    %cst_29 = arith.constant 1.000000e+00 : f32
    %101 = vector.broadcast %cst_29 : f32 to vector<8x128xf32>
    %102 = arith.addf %101, %100 : vector<8x128xf32>
    %103 = tpu.reciprocal %102 {approx = true} : vector<8x128xf32> -> vector<8x128xf32>
    %104 = arith.mulf %92, %15 : vector<8x128xf32>
    %105 = arith.mulf %97, %103 : vector<8x128xf32>
    %106 = arith.mulf %105, %13 : vector<8x128xf32>
    %107 = arith.addf %104, %106 : vector<8x128xf32>
    %c6_i32 = arith.constant 6 : i32
    %108 = arith.truncf %107 : vector<8x128xf32> to vector<8x128xbf16>
    %cst_30 = arith.constant dense<0.000000e+00> : vector<8x256xf32>
    %109 = tpu.matmul %108, %16, %cst_30 {dimension_numbers = #tpu.dot_dimension_numbers<[1], [0], [0], [1], [0, 0, 1, 1], [], []>} : vector<8x128xbf16>, vector<128x256xbf16>, vector<8x256xf32> -> vector<8x256xf32>
    %110 = arith.addf %8, %109 : vector<8x256xf32>
    %111 = vector.extract_strided_slice %110 {offsets = [0, 0], sizes = [8, 128], strides = [1, 1]} : vector<8x256xf32> to vector<8x128xf32>
    %112 = vector.extract_strided_slice %110 {offsets = [0, 128], sizes = [8, 128], strides = [1, 1]} : vector<8x256xf32> to vector<8x128xf32>
    %cst_31 = arith.constant 0.000000e+00 : f32
    %113 = vector.broadcast %cst_31 : f32 to vector<8x128xf32>
    %114 = arith.subf %113, %111 : vector<8x128xf32>
    %115 = math.exp %114 : vector<8x128xf32>
    %cst_32 = arith.constant 1.000000e+00 : f32
    %116 = vector.broadcast %cst_32 : f32 to vector<8x128xf32>
    %117 = arith.addf %116, %115 : vector<8x128xf32>
    %118 = tpu.reciprocal %117 {approx = true} : vector<8x128xf32> -> vector<8x128xf32>
    %119 = arith.mulf %107, %15 : vector<8x128xf32>
    %120 = arith.mulf %112, %118 : vector<8x128xf32>
    %121 = arith.mulf %120, %13 : vector<8x128xf32>
    %122 = arith.addf %119, %121 : vector<8x128xf32>
    %c0_33 = arith.constant 0 : index
    %c0_34 = arith.constant 0 : index
    %123 = vector.load %arg6[%c0_33, %c0_34] : memref<128x8xf32, #tpu.memory_space<vmem>>, vector<128x8xf32>
    %cst_35 = arith.constant dense<0.000000e+00> : vector<8x8xf32>
    %124 = tpu.matmul %122, %123, %cst_35 {dimension_numbers = #tpu.dot_dimension_numbers<[1], [0], [0], [1], [0, 0, 1, 1], [], []>} : vector<8x128xf32>, vector<128x8xf32>, vector<8x8xf32> -> vector<8x8xf32>
    %c0_36 = arith.constant 0 : index
    %c0_37 = arith.constant 0 : index
    %125 = vector.load %arg7[%c0_36, %c0_37] : memref<1x8xf32, #tpu.memory_space<vmem>>, vector<1x8xf32>
    %126 = vector.broadcast %125 : vector<1x8xf32> to vector<8x8xf32>
    %127 = arith.addf %124, %126 : vector<8x8xf32>
    %c0_38 = arith.constant 0 : index
    %c0_39 = arith.constant 0 : index
    %128 = vector.load %arg8[%c0_38, %c0_39] : memref<8x8xf32, #tpu.memory_space<vmem>>, vector<8x8xf32>
    tpu.vector_store %arg8[%c0_38, %c0_39], %127 {strides = array<i32>} : memref<8x8xf32, #tpu.memory_space<vmem>>, vector<8x8xf32>,
    return
  }
}

</mosaic_0001>

<llo_original>
// kernel: jit_ode_solver_forward.1
$region0: #{jit_ode_solver_forward.1}
  #allocation0 [shape = 'u32[]', space=smem, size = 0x4, offset = 0x4, fixed_abs, tag = 'smem constant byte address 0x4 - core index']
  #allocation1 [shape = 'u32[72,128]{1,0:T(1,128)}', space=vmem, size = 0x9000, scoped, tag = 'internal scratch']
  %s0 = inlined_call_operand.hbm [shape: f32[8], index: 0, kind: input, shape index: {}]
  %s1 = inlined_call_operand.hbm [shape: f32[8,16], index: 1, kind: input, shape index: {}]
  %s2 = inlined_call_operand.hbm [shape: f32[16,256], index: 2, kind: input, shape index: {}]
  %s3 = inlined_call_operand.hbm [shape: bf16[128,256], index: 3, kind: input, shape index: {}]
  %s4 = inlined_call_operand.vmem [shape: f32[1,256], index: 4, kind: input, shape index: {}]
  %s5 = inlined_call_operand.vmem [shape: f32[1,128], index: 5, kind: input, shape index: {}]
  %s6 = inlined_call_operand.hbm [shape: f32[128,8], index: 6, kind: input, shape index: {}]
  %s7 = inlined_call_operand.vmem [shape: f32[1,8], index: 7, kind: input, shape index: {}]
  %s8 = inlined_call_operand.hbm [shape: f32[8,8], index: 8, kind: output, shape index: {}]
  %s9 = sld [smem:[#allocation0]]
  $region62: #{jit_ode_solver_forward.1} parent=0
    _
  %s11 = ssub.s32 1, %s9
  %s12 = scalar_select 0, %s11, %s9
  $region1: #{jit_ode_solver_forward.1} parent=0
    #allocation2 [shape = 'u8[512]{0}', space=smem, size = 0x200, scoped, tag = 'input window, operand 0, single buffered']
    #allocation3 [shape = 's32[1]{0}', space=sflag, size = 0x4, scoped, tag = 'scoped memory for jit_ode_solver_forward.1']
    #allocation4 [shape = 's32[1]{0}', space=sflag, size = 0x4, scoped, tag = 'scoped memory for jit_ode_solver_forward.1']
    #allocation5 [shape = 's32[1]{0}', space=sflag, size = 0x4, scoped, tag = 'scoped memory for jit_ode_solver_forward.1']
    #allocation6 [shape = 'u8[4096]{0}', space=vmem, size = 0x1000, scoped, tag = 'input window, operand 1, single buffered']
    #allocation7 [shape = 'u8[16384]{0}', space=vmem, size = 0x4000, scoped, tag = 'input window, operand 2, single buffered']
    #allocation8 [shape = 's32[1]{0}', space=sflag, size = 0x4, scoped, tag = 'scoped memory for jit_ode_solver_forward.1']
    #allocation9 [shape = 'u8[65536]{0}', space=vmem, size = 0x10000, scoped, tag = 'input window, operand 3, single buffered']
    #allocation10 [shape = 'u8[65536]{0}', space=vmem, size = 0x10000, scoped, tag = 'input window, operand 6, single buffered']
    #allocation11 [shape = 's32[1]{0}', space=sflag, size = 0x4, scoped, tag = 'scoped memory for jit_ode_solver_forward.1']
    #allocation12 [shape = 'u8[4096]{0}', space=vmem, size = 0x1000, scoped, tag = 'output window, operand 0, single buffered']
    %13 = vsyncpa [#allocation5], 0
    %14 = vsyncpa [#allocation3], 0
    %15 = vsyncpa [#allocation8], 0
    %16 = vsyncpa [#allocation11], 0
    %17 = vsyncpa [#allocation4], 0
    // Predicated region
    $region2: #{jit_ode_solver_forward.1} parent=1 // pred_check
      _
    $region3: #{jit_ode_solver_forward.1} parent=1 // pred_check_branch
      %19 = sbr.rel (0) target = $region5
    $region4: #{jit_ode_solver_forward.1} parent=1 // pred_region
      %21 = vsyncadd [#allocation5], 0
      %s23 = sshll.u32 %s0, 4
      %s24 = int_to_ptr.hbm [resolvable:$true] %s23
      %26 = dma.hbm_to_smem %s24, 16, [#allocation2], [#allocation5]
    $region5: #{jit_ode_solver_forward.1} parent=1 // pred_fallthru
      _
    // Predicated region
    $region6: #{jit_ode_solver_forward.1} parent=1 // pred_check
      _
    $region7: #{jit_ode_solver_forward.1} parent=1 // pred_check_branch
      %28 = sbr.rel (0) target = $region9
    $region8: #{jit_ode_solver_forward.1} parent=1 // pred_region
      %30 = vsyncadd [#allocation3], 0
      %s32 = sshll.u32 %s1, 4
      %s33 = int_to_ptr.hbm [resolvable:$true] %s32
      %s34 = sshll.u32 [#allocation6], 4
      %s35 = int_to_ptr.vmem [resolvable:$true] %s34
      %37 = dma.hbm_to_vmem [thread:$0]  %s33, 128, %s35, [#allocation3]
    $region9: #{jit_ode_solver_forward.1} parent=1 // pred_fallthru
      _
    // Predicated region
    $region10: #{jit_ode_solver_forward.1} parent=1 // pred_check
      _
    $region11: #{jit_ode_solver_forward.1} parent=1 // pred_check_branch
      %39 = sbr.rel (0) target = $region13
    $region12: #{jit_ode_solver_forward.1} parent=1 // pred_region
      %41 = vsyncadd [#allocation8], 0
      %s42 = sshll.u32 %s2, 4
      %s43 = int_to_ptr.hbm [resolvable:$true] %s42
      %s44 = sshll.u32 [#allocation7], 4
      %s45 = int_to_ptr.vmem [resolvable:$true] %s44
      %50 = dma.hbm_to_vmem [thread:$0]  %s43, 512, %s45, [#allocation8], 256, 256, 16
    $region13: #{jit_ode_solver_forward.1} parent=1 // pred_fallthru
      _
    // Predicated region
    $region14: #{jit_ode_solver_forward.1} parent=1 // pred_check
      _
    $region15: #{jit_ode_solver_forward.1} parent=1 // pred_check_branch
      %52 = sbr.rel (0) target = $region17
    $region16: #{jit_ode_solver_forward.1} parent=1 // pred_region
      %54 = vsyncadd [#allocation8], 0
      %s55 = sshll.u32 %s3, 4
      %s56 = int_to_ptr.hbm [resolvable:$true] %s55
      %s57 = sshll.u32 [#allocation9], 4
      %s58 = int_to_ptr.vmem [resolvable:$true] %s57
      %63 = dma.hbm_to_vmem [thread:$0]  %s56, 2048, %s58, [#allocation8], 128, 128, 8
    $region17: #{jit_ode_solver_forward.1} parent=1 // pred_fallthru
      _
    // Predicated region
    $region18: #{jit_ode_solver_forward.1} parent=1 // pred_check
      _
    $region19: #{jit_ode_solver_forward.1} parent=1 // pred_check_branch
      %65 = sbr.rel (0) target = $region21
    $region20: #{jit_ode_solver_forward.1} parent=1 // pred_region
      _
    $region21: #{jit_ode_solver_forward.1} parent=1 // pred_fallthru
      _
    // Predicated region
    $region22: #{jit_ode_solver_forward.1} parent=1 // pred_check
      _
    $region23: #{jit_ode_solver_forward.1} parent=1 // pred_check_branch
      %67 = sbr.rel (0) target = $region25
    $region24: #{jit_ode_solver_forward.1} parent=1 // pred_region
      _
    $region25: #{jit_ode_solver_forward.1} parent=1 // pred_fallthru
      _
    // Predicated region
    $region26: #{jit_ode_solver_forward.1} parent=1 // pred_check
      _
    $region27: #{jit_ode_solver_forward.1} parent=1 // pred_check_branch
      %69 = sbr.rel (0) target = $region29
    $region28: #{jit_ode_solver_forward.1} parent=1 // pred_region
      %71 = vsyncadd [#allocation11], 0
      %s72 = sshll.u32 %s6, 4
      %s73 = int_to_ptr.hbm [resolvable:$true] %s72
      %s74 = sshll.u32 [#allocation10], 4
      %s75 = int_to_ptr.vmem [resolvable:$true] %s74
      %80 = dma.hbm_to_vmem [thread:$0]  %s73, 2048, %s75, [#allocation11], 128, 128, 8
    $region29: #{jit_ode_solver_forward.1} parent=1 // pred_fallthru
      _
    // Predicated region
    $region30: #{jit_ode_solver_forward.1} parent=1 // pred_check
      _
    $region31: #{jit_ode_solver_forward.1} parent=1 // pred_check_branch
      %82 = sbr.rel (0) target = $region33
    $region32: #{jit_ode_solver_forward.1} parent=1 // pred_region
      _
    $region33: #{jit_ode_solver_forward.1} parent=1 // pred_fallthru
      _
    // Predicated region
    $region34: #{jit_ode_solver_forward.1} parent=1 // pred_check
      _
    $region35: #{jit_ode_solver_forward.1} parent=1 // pred_check_branch
      %84 = sbr.rel (0) target = $region37
    $region36: #{jit_ode_solver_forward.1} parent=1 // pred_region
      %86 = dma.done [#allocation5], 16
    $region37: #{jit_ode_solver_forward.1} parent=1 // pred_fallthru
      _
    // Predicated region
    $region38: #{jit_ode_solver_forward.1} parent=1 // pred_check
      _
    $region39: #{jit_ode_solver_forward.1} parent=1 // pred_check_branch
      %88 = sbr.rel (0) target = $region41
    $region40: #{jit_ode_solver_forward.1} parent=1 // pred_region
      %90 = dma.done [#allocation3], 128
    $region41: #{jit_ode_solver_forward.1} parent=1 // pred_fallthru
      _
    // Predicated region
    $region42: #{jit_ode_solver_forward.1} parent=1 // pred_check
      _
    $region43: #{jit_ode_solver_forward.1} parent=1 // pred_check_branch
      %92 = sbr.rel (0) target = $region45
    $region44: #{jit_ode_solver_forward.1} parent=1 // pred_region
      %94 = dma.done [#allocation8], 512
    $region45: #{jit_ode_solver_forward.1} parent=1 // pred_fallthru
      _
    // Predicated region
    $region46: #{jit_ode_solver_forward.1} parent=1 // pred_check
      _
    $region47: #{jit_ode_solver_forward.1} parent=1 // pred_check_branch
      %96 = sbr.rel (0) target = $region49
    $region48: #{jit_ode_solver_forward.1} parent=1 // pred_region
      %98 = dma.done [#allocation8], 2048
    $region49: #{jit_ode_solver_forward.1} parent=1 // pred_fallthru
      _
    // Predicated region
    $region50: #{jit_ode_solver_forward.1} parent=1 // pred_check
      _
    $region51: #{jit_ode_solver_forward.1} parent=1 // pred_check_branch
      %100 = sbr.rel (0) target = $region53
    $region52: #{jit_ode_solver_forward.1} parent=1 // pred_region
      %102 = dma.done [#allocation11], 2048
    $region53: #{jit_ode_solver_forward.1} parent=1 // pred_fallthru
      _
    %103 = sfence
    %s105 = sld [smem:[#allocation2 + $0x1]]
    %s106 = sld [smem:[#allocation2]]
    %s107 = ssub.f32 %s105, %s106
    %v108 = vld [vmem:[#allocation6] sm:$0xff]
    %v109 = vld [vmem:[#allocation7] sm:$0xff]
    %v110 = vld [vmem:[#allocation7 + $0x8] sm:$0xff]
    %v111 = vld [vmem:[#allocation7 + $0x10] sm:$0xff]
    %v112 = vld [vmem:[#allocation7 + $0x18] sm:$0xff]
    %v113 = vld [vmem:[%s4] sm:$0x3]
    %v115 = vperm.slane %v113, 0
    %v116 = vperm.slane %v113, 1
    %vm119 = vcmask 130048
    %v121 = vsel %vm119, %v108, 0
    %123 = vmatpush.msra.mxu0 0.0
    %124 = vmatpush.msra.mxu0 0.0
    %125 = vmatpush.msra.mxu0 0.0
    %126 = vmatpush.msra.mxu0 0.0
    %127 = vmatpush.msra.mxu0 0.0
    %128 = vmatpush.msra.mxu0 0.0
    %129 = vmatpush.msra.mxu0 0.0
    %130 = vmatpush.msra.mxu0 0.0
    %131 = vmatpush.msra.mxu0 0.0
    %132 = vmatpush.msra.mxu0 0.0
    %133 = vmatpush.msra.mxu0 0.0
    %134 = vmatpush.msra.mxu0 0.0
    %135 = vmatpush.msra.mxu0 0.0
    %136 = vmatpush.msra.mxu0 0.0
    %137 = vmatpush.msra.mxu0 %v111
    %138 = vmatpush.msra.mxu0 %v109
    %139 = vmatmul.f32.gmra.mxu0 %v121
    %v140 = vpop.f32.mrf.mxu0
    %v141 = vadd.f32 %v115, %v140
    %142 = vdwg.mxu0
    %143 = vmatpush.msra.mxu0 0.0
    %144 = vmatpush.msra.mxu0 0.0
    %145 = vmatpush.msra.mxu0 0.0
    %146 = vmatpush.msra.mxu0 0.0
    %147 = vmatpush.msra.mxu0 0.0
    %148 = vmatpush.msra.mxu0 0.0
    %149 = vmatpush.msra.mxu0 0.0
    %150 = vmatpush.msra.mxu0 0.0
    %151 = vmatpush.msra.mxu0 0.0
    %152 = vmatpush.msra.mxu0 0.0
    %153 = vmatpush.msra.mxu0 0.0
    %154 = vmatpush.msra.mxu0 0.0
    %155 = vmatpush.msra.mxu0 0.0
    %156 = vmatpush.msra.mxu0 0.0
    %157 = vmatpush.msra.mxu0 %v112
    %158 = vmatpush.msra.mxu0 %v110
    %159 = vmatmul.f32.gmra.mxu0 %v121
    %v160 = vpop.f32.mrf.mxu0
    %v161 = vadd.f32 %v116, %v160
    %162 = vdwg.mxu0
    %v163 = vld [vmem:[%s5] sm:$0x1]
    %v164 = vstv %s107
    %v165 = vmul.f32 %v164, %v163
    %v167 = vperm.slane %v165, 0
    %v169 = vsub.f32 1.0, %v167
    %v170 = vld [vmem:[#allocation9] sm:$0xff]
    %v171 = vld [vmem:[#allocation9 + $0x8] sm:$0xff]
    %v172 = vld [vmem:[#allocation9 + $0x10] sm:$0xff]
    %v173 = vld [vmem:[#allocation9 + $0x18] sm:$0xff]
    %v174 = vld [vmem:[#allocation9 + $0x20] sm:$0xff]
    %v175 = vld [vmem:[#allocation9 + $0x28] sm:$0xff]
    %v176 = vld [vmem:[#allocation9 + $0x30] sm:$0xff]
    %v177 = vld [vmem:[#allocation9 + $0x38] sm:$0xff]
    %v178 = vld [vmem:[#allocation9 + $0x40] sm:$0xff]
    %v179 = vld [vmem:[#allocation9 + $0x48] sm:$0xff]
    %v180 = vld [vmem:[#allocation9 + $0x50] sm:$0xff]
    %v181 = vld [vmem:[#allocation9 + $0x58] sm:$0xff]
    %v182 = vld [vmem:[#allocation9 + $0x60] sm:$0xff]
    %v183 = vld [vmem:[#allocation9 + $0x68] sm:$0xff]
    %v184 = vld [vmem:[#allocation9 + $0x70] sm:$0xff]
    %v185 = vld [vmem:[#allocation9 + $0x78] sm:$0xff]
    %v202 = vunpack.c.l.b16 %v170
    %v203 = vunpack.c.h.b16 %v170
    %v204 = vunpack.c.l.b16 %v171
    %v205 = vunpack.c.h.b16 %v171
    %v206 = vunpack.c.l.b16 %v172
    %v207 = vunpack.c.h.b16 %v172
    %v208 = vunpack.c.l.b16 %v173
    %v209 = vunpack.c.h.b16 %v173
    %v210 = vunpack.c.l.b16 %v174
    %v211 = vunpack.c.h.b16 %v174
    %v212 = vunpack.c.l.b16 %v175
    %v213 = vunpack.c.h.b16 %v175
    %v214 = vunpack.c.l.b16 %v176
    %v215 = vunpack.c.h.b16 %v176
    %v216 = vunpack.c.l.b16 %v177
    %v217 = vunpack.c.h.b16 %v177
    %v218 = vunpack.c.l.b16 %v178
    %v219 = vunpack.c.h.b16 %v178
    %v220 = vunpack.c.l.b16 %v179
    %v221 = vunpack.c.h.b16 %v179
    %v222 = vunpack.c.l.b16 %v180
    %v223 = vunpack.c.h.b16 %v180
    %v224 = vunpack.c.l.b16 %v181
    %v225 = vunpack.c.h.b16 %v181
    %v226 = vunpack.c.l.b16 %v182
    %v227 = vunpack.c.h.b16 %v182
    %v228 = vunpack.c.l.b16 %v183
    %v229 = vunpack.c.h.b16 %v183
    %v230 = vunpack.c.l.b16 %v184
    %v231 = vunpack.c.h.b16 %v184
    %v232 = vunpack.c.l.b16 %v185
    %v233 = vunpack.c.h.b16 %v185
    %v234 = vpack.c.b16 %v204, %v202
    %v235 = vpack.c.b16 %v205, %v203
    %v236 = vpack.c.b16 %v208, %v206
    %v237 = vpack.c.b16 %v209, %v207
    %v238 = vpack.c.b16 %v212, %v210
    %v239 = vpack.c.b16 %v213, %v211
    %v240 = vpack.c.b16 %v216, %v214
    %v241 = vpack.c.b16 %v217, %v215
    %v242 = vpack.c.b16 %v220, %v218
    %v243 = vpack.c.b16 %v221, %v219
    %v244 = vpack.c.b16 %v224, %v222
    %v245 = vpack.c.b16 %v225, %v223
    %v246 = vpack.c.b16 %v228, %v226
    %v247 = vpack.c.b16 %v229, %v227
    %v248 = vpack.c.b16 %v232, %v230
    %v249 = vpack.c.b16 %v233, %v231
    %266 = vmatpush.bf16.msra.mxu0 %v248
    %267 = vmatpush.bf16.msra.mxu0 %v246
    %268 = vmatpush.bf16.msra.mxu0 %v244
    %269 = vmatpush.bf16.msra.mxu0 %v242
    %270 = vmatpush.bf16.msra.mxu0 %v240
    %271 = vmatpush.bf16.msra.mxu0 %v238
    %272 = vmatpush.bf16.msra.mxu0 %v236
    %273 = vmatpush.bf16.msra.mxu0 %v234
    %274 = vmatmul.bf16.gmra.mxu0 0
    %v275 = vpop.f32.mrf.mxu0
    %v276 = vadd.f32 0.0, %v275
    %v277 = vpop.f32.mrf.mxu0
    %278 = vdwg.mxu0
    %279 = vmatpush.bf16.msra.mxu0 %v249
    %280 = vmatpush.bf16.msra.mxu0 %v247
    %281 = vmatpush.bf16.msra.mxu0 %v245
    %282 = vmatpush.bf16.msra.mxu0 %v243
    %283 = vmatpush.bf16.msra.mxu0 %v241
    %284 = vmatpush.bf16.msra.mxu0 %v239
    %285 = vmatpush.bf16.msra.mxu0 %v237
    %286 = vmatpush.bf16.msra.mxu0 %v235
    %287 = vmatmul.bf16.gmra.mxu0 0
    %v288 = vpop.f32.mrf.mxu0
    %v289 = vadd.f32 0.0, %v288
    %v290 = vpop.f32.mrf.mxu0
    %291 = vdwg.mxu0
    %v292 = vadd.f32 %v141, %v276
    %v293 = vadd.f32 %v161, %v289
    %v294 = vsub.f32 0.0, %v292
    %v295 = vmul.f32 %v294, 1.442695
    %v296 = vpow.pop %v295
    %v297 = vadd.f32 %v296, 1.0
    %v298 = vrcp.pop %v297
    %v299 = vmul.f32 %v169, 0.0
    %v300 = vmul.f32 %v293, %v298
    %v301 = vmul.f32 %v300, %v167
    %v302 = vadd.f32 %v299, %v301
    %v303 = vpack.c.bf16 %v302, %v302
    %304 = vmatpush.bf16.msra.mxu0 %v248
    %305 = vmatpush.bf16.msra.mxu0 %v246
    %306 = vmatpush.bf16.msra.mxu0 %v244
    %307 = vmatpush.bf16.msra.mxu0 %v242
    %308 = vmatpush.bf16.msra.mxu0 %v240
    %309 = vmatpush.bf16.msra.mxu0 %v238
    %310 = vmatpush.bf16.msra.mxu0 %v236
    %311 = vmatpush.bf16.msra.mxu0 %v234
    %312 = vmatmul.bf16.gmra.mxu0 %v303
    %v313 = vpop.f32.mrf.mxu0
    %v314 = vadd.f32 0.0, %v313
    %v315 = vpop.f32.mrf.mxu0
    %316 = vdwg.mxu0
    %317 = vmatpush.bf16.msra.mxu0 %v249
    %318 = vmatpush.bf16.msra.mxu0 %v247
    %319 = vmatpush.bf16.msra.mxu0 %v245
    %320 = vmatpush.bf16.msra.mxu0 %v243
    %321 = vmatpush.bf16.msra.mxu0 %v241
    %322 = vmatpush.bf16.msra.mxu0 %v239
    %323 = vmatpush.bf16.msra.mxu0 %v237
    %324 = vmatpush.bf16.msra.mxu0 %v235
    %325 = vmatmul.bf16.gmra.mxu0 %v303
    %v326 = vpop.f32.mrf.mxu0
    %v327 = vadd.f32 0.0, %v326
    %v328 = vpop.f32.mrf.mxu0
    %329 = vdwg.mxu0
    %v330 = vadd.f32 %v141, %v314
    %v331 = vadd.f32 %v161, %v327
    %v332 = vsub.f32 0.0, %v330
    %v333 = vmul.f32 %v332, 1.442695
    %v334 = vpow.pop %v333
    %v335 = vadd.f32 %v334, 1.0
    %v336 = vrcp.pop %v335
    %v337 = vmul.f32 %v302, %v169
    %v338 = vmul.f32 %v331, %v336
    %v339 = vmul.f32 %v338, %v167
    %v340 = vadd.f32 %v337, %v339
    %v341 = vpack.c.bf16 %v340, %v340
    %342 = vmatpush.bf16.msra.mxu0 %v248
    %343 = vmatpush.bf16.msra.mxu0 %v246
    %344 = vmatpush.bf16.msra.mxu0 %v244
    %345 = vmatpush.bf16.msra.mxu0 %v242
    %346 = vmatpush.bf16.msra.mxu0 %v240
    %347 = vmatpush.bf16.msra.mxu0 %v238
    %348 = vmatpush.bf16.msra.mxu0 %v236
    %349 = vmatpush.bf16.msra.mxu0 %v234
    %350 = vmatmul.bf16.gmra.mxu0 %v341
    %v351 = vpop.f32.mrf.mxu0
    %v352 = vadd.f32 0.0, %v351
    %v353 = vpop.f32.mrf.mxu0
    %354 = vdwg.mxu0
    %355 = vmatpush.bf16.msra.mxu0 %v249
    %356 = vmatpush.bf16.msra.mxu0 %v247
    %357 = vmatpush.bf16.msra.mxu0 %v245
    %358 = vmatpush.bf16.msra.mxu0 %v243
    %359 = vmatpush.bf16.msra.mxu0 %v241
    %360 = vmatpush.bf16.msra.mxu0 %v239
    %361 = vmatpush.bf16.msra.mxu0 %v237
    %362 = vmatpush.bf16.msra.mxu0 %v235
    %363 = vmatmul.bf16.gmra.mxu0 %v341
    %v364 = vpop.f32.mrf.mxu0
    %v365 = vadd.f32 0.0, %v364
    %v366 = vpop.f32.mrf.mxu0
    %367 = vdwg.mxu0
    %v368 = vadd.f32 %v141, %v352
    %v369 = vadd.f32 %v161, %v365
    %v370 = vsub.f32 0.0, %v368
    %v371 = vmul.f32 %v370, 1.442695
    %v372 = vpow.pop %v371
    %v373 = vadd.f32 %v372, 1.0
    %v374 = vrcp.pop %v373
    %v375 = vmul.f32 %v340, %v169
    %v376 = vmul.f32 %v369, %v374
    %v377 = vmul.f32 %v376, %v167
    %v378 = vadd.f32 %v375, %v377
    %v379 = vpack.c.bf16 %v378, %v378
    %380 = vmatpush.bf16.msra.mxu0 %v248
    %381 = vmatpush.bf16.msra.mxu0 %v246
    %382 = vmatpush.bf16.msra.mxu0 %v244
    %383 = vmatpush.bf16.msra.mxu0 %v242
    %384 = vmatpush.bf16.msra.mxu0 %v240
    %385 = vmatpush.bf16.msra.mxu0 %v238
    %386 = vmatpush.bf16.msra.mxu0 %v236
    %387 = vmatpush.bf16.msra.mxu0 %v234
    %388 = vmatmul.bf16.gmra.mxu0 %v379
    %v389 = vpop.f32.mrf.mxu0
    %v390 = vadd.f32 0.0, %v389
    %v391 = vpop.f32.mrf.mxu0
    %392 = vdwg.mxu0
    %393 = vmatpush.bf16.msra.mxu0 %v249
    %394 = vmatpush.bf16.msra.mxu0 %v247
    %395 = vmatpush.bf16.msra.mxu0 %v245
    %396 = vmatpush.bf16.msra.mxu0 %v243
    %397 = vmatpush.bf16.msra.mxu0 %v241
    %398 = vmatpush.bf16.msra.mxu0 %v239
    %399 = vmatpush.bf16.msra.mxu0 %v237
    %400 = vmatpush.bf16.msra.mxu0 %v235
    %401 = vmatmul.bf16.gmra.mxu0 %v379
    %v402 = vpop.f32.mrf.mxu0
    %v403 = vadd.f32 0.0, %v402
    %v404 = vpop.f32.mrf.mxu0
    %405 = vdwg.mxu0
    %v406 = vadd.f32 %v141, %v390
    %v407 = vadd.f32 %v161, %v403
    %v408 = vsub.f32 0.0, %v406
    %v409 = vmul.f32 %v408, 1.442695
    %v410 = vpow.pop %v409
    %v411 = vadd.f32 %v410, 1.0
    %v412 = vrcp.pop %v411
    %v413 = vmul.f32 %v378, %v169
    %v414 = vmul.f32 %v407, %v412
    %v415 = vmul.f32 %v414, %v167
    %v416 = vadd.f32 %v413, %v415
    %v417 = vpack.c.bf16 %v416, %v416
    %418 = vmatpush.bf16.msra.mxu0 %v248
    %419 = vmatpush.bf16.msra.mxu0 %v246
    %420 = vmatpush.bf16.msra.mxu0 %v244
    %421 = vmatpush.bf16.msra.mxu0 %v242
    %422 = vmatpush.bf16.msra.mxu0 %v240
    %423 = vmatpush.bf16.msra.mxu0 %v238
    %424 = vmatpush.bf16.msra.mxu0 %v236
    %425 = vmatpush.bf16.msra.mxu0 %v234
    %426 = vmatmul.bf16.gmra.mxu0 %v417
    %v427 = vpop.f32.mrf.mxu0
    %v428 = vadd.f32 0.0, %v427
    %v429 = vpop.f32.mrf.mxu0
    %430 = vdwg.mxu0
    %431 = vmatpush.bf16.msra.mxu0 %v249
    %432 = vmatpush.bf16.msra.mxu0 %v247
    %433 = vmatpush.bf16.msra.mxu0 %v245
    %434 = vmatpush.bf16.msra.mxu0 %v243
    %435 = vmatpush.bf16.msra.mxu0 %v241
    %436 = vmatpush.bf16.msra.mxu0 %v239
    %437 = vmatpush.bf16.msra.mxu0 %v237
    %438 = vmatpush.bf16.msra.mxu0 %v235
    %439 = vmatmul.bf16.gmra.mxu0 %v417
    %v440 = vpop.f32.mrf.mxu0
    %v441 = vadd.f32 0.0, %v440
    %v442 = vpop.f32.mrf.mxu0
    %443 = vdwg.mxu0
    %v444 = vadd.f32 %v141, %v428
    %v445 = vadd.f32 %v161, %v441
    %v446 = vsub.f32 0.0, %v444
    %v447 = vmul.f32 %v446, 1.442695
    %v448 = vpow.pop %v447
    %v449 = vadd.f32 %v448, 1.0
    %v450 = vrcp.pop %v449
    %v451 = vmul.f32 %v416, %v169
    %v452 = vmul.f32 %v445, %v450
    %v453 = vmul.f32 %v452, %v167
    %v454 = vadd.f32 %v451, %v453
    %v455 = vpack.c.bf16 %v454, %v454
    %456 = vmatpush.bf16.msra.mxu0 %v248
    %457 = vmatpush.bf16.msra.mxu0 %v246
    %458 = vmatpush.bf16.msra.mxu0 %v244
    %459 = vmatpush.bf16.msra.mxu0 %v242
    %460 = vmatpush.bf16.msra.mxu0 %v240
    %461 = vmatpush.bf16.msra.mxu0 %v238
    %462 = vmatpush.bf16.msra.mxu0 %v236
    %463 = vmatpush.bf16.msra.mxu0 %v234
    %464 = vmatmul.bf16.gmra.mxu0 %v455
    %v465 = vpop.f32.mrf.mxu0
    %v466 = vadd.f32 0.0, %v465
    %v467 = vpop.f32.mrf.mxu0
    %468 = vdwg.mxu0
    %469 = vmatpush.bf16.msra.mxu0 %v249
    %470 = vmatpush.bf16.msra.mxu0 %v247
    %471 = vmatpush.bf16.msra.mxu0 %v245
    %472 = vmatpush.bf16.msra.mxu0 %v243
    %473 = vmatpush.bf16.msra.mxu0 %v241
    %474 = vmatpush.bf16.msra.mxu0 %v239
    %475 = vmatpush.bf16.msra.mxu0 %v237
    %476 = vmatpush.bf16.msra.mxu0 %v235
    %477 = vmatmul.bf16.gmra.mxu0 %v455
    %v478 = vpop.f32.mrf.mxu0
    %v479 = vadd.f32 0.0, %v478
    %v480 = vpop.f32.mrf.mxu0
    %481 = vdwg.mxu0
    %v482 = vadd.f32 %v141, %v466
    %v483 = vadd.f32 %v161, %v479
    %v484 = vsub.f32 0.0, %v482
    %v485 = vmul.f32 %v484, 1.442695
    %v486 = vpow.pop %v485
    %v487 = vadd.f32 %v486, 1.0
    %v488 = vrcp.pop %v487
    %v489 = vmul.f32 %v454, %v169
    %v490 = vmul.f32 %v483, %v488
    %v491 = vmul.f32 %v490, %v167
    %v492 = vadd.f32 %v489, %v491
    %v493 = vpack.c.bf16 %v492, %v492
    %494 = vmatpush.bf16.msra.mxu0 %v248
    %495 = vmatpush.bf16.msra.mxu0 %v246
    %496 = vmatpush.bf16.msra.mxu0 %v244
    %497 = vmatpush.bf16.msra.mxu0 %v242
    %498 = vmatpush.bf16.msra.mxu0 %v240
    %499 = vmatpush.bf16.msra.mxu0 %v238
    %500 = vmatpush.bf16.msra.mxu0 %v236
    %501 = vmatpush.bf16.msra.mxu0 %v234
    %502 = vmatmul.bf16.gmra.mxu0 %v493
    %v503 = vpop.f32.mrf.mxu0
    %v504 = vadd.f32 0.0, %v503
    %v505 = vpop.f32.mrf.mxu0
    %506 = vdwg.mxu0
    %507 = vmatpush.bf16.msra.mxu0 %v249
    %508 = vmatpush.bf16.msra.mxu0 %v247
    %509 = vmatpush.bf16.msra.mxu0 %v245
    %510 = vmatpush.bf16.msra.mxu0 %v243
    %511 = vmatpush.bf16.msra.mxu0 %v241
    %512 = vmatpush.bf16.msra.mxu0 %v239
    %513 = vmatpush.bf16.msra.mxu0 %v237
    %514 = vmatpush.bf16.msra.mxu0 %v235
    %515 = vmatmul.bf16.gmra.mxu0 %v493
    %v516 = vpop.f32.mrf.mxu0
    %v517 = vadd.f32 0.0, %v516
    %v518 = vpop.f32.mrf.mxu0
    %519 = vdwg.mxu0
    %v520 = vadd.f32 %v141, %v504
    %v521 = vadd.f32 %v161, %v517
    %v522 = vsub.f32 0.0, %v520
    %v523 = vmul.f32 %v522, 1.442695
    %v524 = vpow.pop %v523
    %v525 = vadd.f32 %v524, 1.0
    %v526 = vrcp.pop %v525
    %v527 = vmul.f32 %v492, %v169
    %v528 = vmul.f32 %v521, %v526
    %v529 = vmul.f32 %v528, %v167
    %v530 = vadd.f32 %v527, %v529
    %v531 = vld [vmem:[#allocation10] sm:$0xff]
    %v532 = vld [vmem:[#allocation10 + $0x8] sm:$0xff]
    %v533 = vld [vmem:[#allocation10 + $0x10] sm:$0xff]
    %v534 = vld [vmem:[#allocation10 + $0x18] sm:$0xff]
    %v535 = vld [vmem:[#allocation10 + $0x20] sm:$0xff]
    %v536 = vld [vmem:[#allocation10 + $0x28] sm:$0xff]
    %v537 = vld [vmem:[#allocation10 + $0x30] sm:$0xff]
    %v538 = vld [vmem:[#allocation10 + $0x38] sm:$0xff]
    %v539 = vld [vmem:[#allocation10 + $0x40] sm:$0xff]
    %v540 = vld [vmem:[#allocation10 + $0x48] sm:$0xff]
    %v541 = vld [vmem:[#allocation10 + $0x50] sm:$0xff]
    %v542 = vld [vmem:[#allocation10 + $0x58] sm:$0xff]
    %v543 = vld [vmem:[#allocation10 + $0x60] sm:$0xff]
    %v544 = vld [vmem:[#allocation10 + $0x68] sm:$0xff]
    %v545 = vld [vmem:[#allocation10 + $0x70] sm:$0xff]
    %v546 = vld [vmem:[#allocation10 + $0x78] sm:$0xff]
    %v547 = vld [vmem:[%s7] sm:$0x1]
    %v549 = vperm.slane %v547, 0
    %551 = vmatpush.msra.mxu0 %v546
    %552 = vmatpush.msra.mxu0 %v545
    %553 = vmatpush.msra.mxu0 %v544
    %554 = vmatpush.msra.mxu0 %v543
    %555 = vmatpush.msra.mxu0 %v542
    %556 = vmatpush.msra.mxu0 %v541
    %557 = vmatpush.msra.mxu0 %v540
    %558 = vmatpush.msra.mxu0 %v539
    %559 = vmatpush.msra.mxu0 %v538
    %560 = vmatpush.msra.mxu0 %v537
    %561 = vmatpush.msra.mxu0 %v536
    %562 = vmatpush.msra.mxu0 %v535
    %563 = vmatpush.msra.mxu0 %v534
    %564 = vmatpush.msra.mxu0 %v533
    %565 = vmatpush.msra.mxu0 %v532
    %566 = vmatpush.msra.mxu0 %v531
    %567 = vmatmul.f32.gmra.mxu0 %v530
    %v568 = vpop.f32.mrf.mxu0
    %v569 = vadd.f32 %v549, %v568
    %570 = vdwg.mxu0
    %vm571 = vcmask 64512
    %572 = vst.msk [vmem:[#allocation12] sm:$0xff] %vm571, %v569
    // Predicated region
    $region54: #{jit_ode_solver_forward.1} parent=1 // pred_check
      _
    $region55: #{jit_ode_solver_forward.1} parent=1 // pred_check_branch
      %574 = sbr.rel (0) target = $region57
    $region56: #{jit_ode_solver_forward.1} parent=1 // pred_region
      %576 = vsyncadd [#allocation4], 0
      %s578 = sshll.u32 [#allocation12], 4
      %s579 = int_to_ptr.vmem [resolvable:$true] %s578
      %s580 = sshll.u32 %s8, 4
      %s581 = int_to_ptr.hbm [resolvable:$true] %s580
      %583 = dma.vmem_to_hbm [thread:$0]  %s579, 128, %s581, [#allocation4]
    $region57: #{jit_ode_solver_forward.1} parent=1 // pred_fallthru
      _
    // Predicated region
    $region58: #{jit_ode_solver_forward.1} parent=1 // pred_check
      _
    $region59: #{jit_ode_solver_forward.1} parent=1 // pred_check_branch
      %585 = sbr.rel (0) target = $region61
    $region60: #{jit_ode_solver_forward.1} parent=1 // pred_region
      %587 = dma.done [#allocation4], 128
    $region61: #{jit_ode_solver_forward.1} parent=1 // pred_fallthru
      _
    %588 = vsyncpa [#allocation3], 1
    %589 = vsyncpa [#allocation8], 1
    %590 = vsyncpa [#allocation11], 1
    %591 = vsyncpa [#allocation4], 1
    %592 = vsyncpa [#allocation5], 1

</llo_original>
